<compile_context>
chip_gen: v7x
topology: tpu7x:2x2x1
jax: 0.10.0
libtpu: 0.0.40
codegen_flags: <defaults>
</compile_context>

<pallas_src>
import functools

import jax
import jax.numpy as jnp
from jax.experimental import pallas as pl
from jax.experimental.pallas import tpu as pltpu


def _round_up(x, m):
    return (x + m - 1) // m * m


def _generator_kernel(x_ref, w_ref, b_ref, out_ref):
    """One batch tile: single fused affine map  out = x @ W_big + b_big."""
    x = x_ref[...].astype(w_ref.dtype)                       # f32 -> matmul dtype (VPU)
    y = jnp.dot(x, w_ref[...], preferred_element_type=jnp.float32) + b_ref[...]
    out_ref[...] = y.astype(out_ref.dtype)


def fuse_params(params, matmul_dtype=jnp.bfloat16):
    """Pre-compose the fully-linear network into one affine map (exact up to
    f32 re-association; a single cast to `matmul_dtype` at the end).

    Returns W_big (nf, nf+2z) in `matmul_dtype` and b_big (1, nf+2z) in f32,
    laid out as [x_hat | z | z_hat] to match the kernel's output slab."""
    f32 = jnp.float32

    def compose(w1, b1, w2, b2):
        w = w1.astype(f32) @ w2.astype(f32)
        b = b1.astype(f32) @ w2.astype(f32) + b2.astype(f32)
        return w, b

    we1, be1 = compose(params["w1e1"], params["b1e1"], params["w2e1"], params["b2e1"])
    wd, bd = compose(params["w1d"], params["b1d"], params["w2d"], params["b2d"])
    we2, be2 = compose(params["w1e2"], params["b1e2"], params["w2e2"], params["b2e2"])

    n_features = wd.shape[1]
    size_z = we1.shape[1]

    # z     = x @ We1 + be1
    # x_hat = z @ Wd + bd            =  x @ (We1@Wd)      + (be1@Wd + bd)
    # z_hat = x_hat @ We2 + be2      =  x @ (We1@Wd@We2)  + ((be1@Wd+bd)@We2 + be2)
    w_xhat = we1 @ wd                         # (nf, nf)
    b_xhat = be1 @ wd + bd                    # (1, nf)
    w_zhat = w_xhat @ we2                     # (nf, z)
    b_zhat = b_xhat @ we2 + be2               # (1, z)

    w_big = jnp.concatenate([w_xhat, we1, w_zhat], axis=1).astype(matmul_dtype)
    b_big = jnp.concatenate([b_xhat, be1, b_zhat], axis=1)   # f32, (1, nf + 2z)

    return {
        "w_big": w_big,                 # (nf, nf + 2*z), matmul dtype
        "b_big": b_big,                 # (1,  nf + 2*z), f32
        "n_features": n_features,
        "size_z": size_z,
    }


def generator_net_forward(x, fused, *, tile_b=2048, out_dtype=jnp.float32,
                          vmem_limit_bytes=32 * 1024 * 1024):
    """Returns (generated_data, latent_input, latent_output), matching the
    PyTorch GeneratorNet.forward return order."""
    B, n_features = x.shape
    assert fused["n_features"] == n_features
    size_z = fused["size_z"]
    out_width = n_features + 2 * size_z
    assert fused["w_big"].shape == (n_features, out_width)

    x = x.astype(jnp.float32)           # kernel casts to matmul dtype internally

    # Batch tiling: multiples of 8 sublanes; pick the largest tile <= tile_b
    # that covers B, padding B up to a whole number of tiles if needed.
    tile_b = max(8, min(_round_up(tile_b, 8), _round_up(B, 8)))
    b_pad = _round_up(B, tile_b)
    # Keep the ("parallel",) batch grid >= 2 so v7x's 2 TensorCores both get
    # work; costs at most one extra ~0.35us grid step on single-core chips.
    if b_pad // tile_b < 2 and b_pad >= 16:
        tile_b = _round_up(b_pad // 2, 8)
        b_pad = _round_up(B, tile_b)
    if b_pad != B:
        x = jnp.pad(x, ((0, b_pad - B), (0, 0)))
    grid = (b_pad // tile_b,)

    w_itemsize = jnp.dtype(fused["w_big"].dtype).itemsize
    out_itemsize = jnp.dtype(out_dtype).itemsize
    flops = 2 * b_pad * n_features * out_width + b_pad * out_width
    bytes_accessed = (
        b_pad * n_features * 4                       # x (f32 in)
        + fused["w_big"].size * w_itemsize           # fused weights
        + fused["b_big"].size * 4                    # fused bias
        + b_pad * out_width * out_itemsize           # output slab
    )

    out = pl.pallas_call(
        _generator_kernel,
        out_shape=jax.ShapeDtypeStruct((b_pad, out_width), out_dtype),
        grid=grid,
        in_specs=[
            pl.BlockSpec((tile_b, n_features), lambda i: (i, 0)),       # x (pipelined)
            pl.BlockSpec(fused["w_big"].shape, lambda i: (0, 0)),       # W_big resident
            pl.BlockSpec(fused["b_big"].shape, lambda i: (0, 0)),       # b_big resident
        ],
        out_specs=pl.BlockSpec((tile_b, out_width), lambda i: (i, 0)),  # [xhat|z|zhat]
        compiler_params=pltpu.CompilerParams(
            dimension_semantics=("parallel",),
            vmem_limit_bytes=vmem_limit_bytes,
        ),
        cost_estimate=pl.CostEstimate(
            flops=flops, transcendentals=0, bytes_accessed=bytes_accessed),
    )(x, fused["w_big"], fused["b_big"])

    generated = out[:B, :n_features]
    latent_in = out[:B, n_features:n_features + size_z]
    latent_out = out[:B, n_features + size_z:]
    return generated, latent_in, latent_out


def init_params(key, size_z, n_features, n_hidden):
    """PyTorch nn.Linear stores W as (out, in); we store the transposed (in, out)
    so each layer is x @ W + b."""
    def linear_init(k, fan_in, fan_out):
        kw, kb = jax.random.split(k)
        bound = 1.0 / jnp.sqrt(jnp.float32(fan_in))
        w = jax.random.uniform(kw, (fan_in, fan_out), jnp.float32, -bound, bound)
        b = jax.random.uniform(kb, (1, fan_out), jnp.float32, -bound, bound)
        return w, b

    keys = jax.random.split(key, 6)
    p = {}
    p["w1e1"], p["b1e1"] = linear_init(keys[0], n_features, n_hidden)   # encoder1
    p["w2e1"], p["b2e1"] = linear_init(keys[1], n_hidden, size_z)
    p["w1d"],  p["b1d"]  = linear_init(keys[2], size_z, n_hidden)       # decoder
    p["w2d"],  p["b2d"]  = linear_init(keys[3], n_hidden, n_features)
    p["w1e2"], p["b1e2"] = linear_init(keys[4], n_features, n_hidden)   # encoder2
    p["w2e2"], p["b2e2"] = linear_init(keys[5], n_hidden, size_z)
    return p


def reference_forward(x, p):
    """Exact layer-by-layer f32 reference (mirrors the PyTorch module)."""
    z = (x @ p["w1e1"] + p["b1e1"]) @ p["w2e1"] + p["b2e1"]
    x_hat = (z @ p["w1d"] + p["b1d"]) @ p["w2d"] + p["b2d"]
    z_hat = (x_hat @ p["w1e2"] + p["b1e2"]) @ p["w2e2"] + p["b2e2"]
    return x_hat, z, z_hat


if __name__ == "__main__":
    # GeneratorNet(size_z=8, n_features=32, n_hidden_features=[16], linear=True, bias=True)
    size_z, n_features, n_hidden = 8, 32, 16
    batch = 512  # auto-tiled into 2 x 256-row tiles (grid >= 2 for v7x's 2 TCs)

    key = jax.random.PRNGKey(0)
    k_x, k_p = jax.random.split(key)
    x = jax.random.normal(k_x, (batch, n_features), jnp.float32)
    params = init_params(k_p, size_z, n_features, n_hidden)

    ref_gen, ref_z_in, ref_z_out = reference_forward(x, params)

    # bf16 MXU path (default).
    fused = fuse_params(params, matmul_dtype=jnp.bfloat16)
    gen, z_in, z_out = generator_net_forward(x, fused)
    jax.block_until_ready((gen, z_in, z_out))
    # Single bf16 cast of the depth-3 composed weights -> only rounding error
    # vs. the exact f32 layer-by-layer reference.
    for got, ref in ((gen, ref_gen), (z_in, ref_z_in), (z_out, ref_z_out)):
        assert got.shape == ref.shape
        assert jnp.allclose(got, ref, rtol=5e-2, atol=5e-2), \
            float(jnp.max(jnp.abs(got - ref)))

    # f32 matmul path sanity check (only re-association error from composition).
    fused_f32 = fuse_params(params, matmul_dtype=jnp.float32)
    gen32, z_in32, z_out32 = generator_net_forward(x, fused_f32)
    jax.block_until_ready((gen32, z_in32, z_out32))
    for got, ref in ((gen32, ref_gen), (z_in32, ref_z_in), (z_out32, ref_z_out)):
        assert jnp.allclose(got, ref, rtol=1e-4, atol=1e-4), \
            float(jnp.max(jnp.abs(got - ref)))

    print("KERNEL_OK")
</pallas_src>

<mosaic_0001>
module attributes {stable_mosaic.version = 11 : i64} {
  func.func @_generator_kernel(%arg0: i32, %arg1: memref<256x32xf32, #tpu.memory_space<vmem>>, %arg2: memref<32x48xbf16, #tpu.memory_space<vmem>>, %arg3: memref<1x48xf32, #tpu.memory_space<vmem>>, %arg4: memref<256x48xf32, #tpu.memory_space<vmem>>) attributes {dimension_semantics = [#tpu.dimension_semantics<parallel>], iteration_bounds = array<i64: 2>, scalar_prefetch = 0 : i64, scratch_operands = 0 : i64, tpu.core_type = #tpu.core_type<tc>, window_params = [{transform_indices = @transform_0, window_bounds = array<i64: 256, 32>}, {pipeline_mode = #tpu.pipeline_mode<synchronous>, transform_indices = @transform_1, window_bounds = array<i64: 32, 48>}, {pipeline_mode = #tpu.pipeline_mode<synchronous>, transform_indices = @transform_2, window_bounds = array<i64: 1, 48>}, {transform_indices = @transform_3, window_bounds = array<i64: 256, 48>}]} {
    %c0 = arith.constant 0 : index
    %c0_0 = arith.constant 0 : index
    %0 = vector.load %arg1[%c0, %c0_0] : memref<256x32xf32, #tpu.memory_space<vmem>>, vector<256x32xf32>
    %1 = arith.truncf %0 : vector<256x32xf32> to vector<256x32xbf16>
    %c0_1 = arith.constant 0 : index
    %c0_2 = arith.constant 0 : index
    %2 = vector.load %arg2[%c0_1, %c0_2] : memref<32x48xbf16, #tpu.memory_space<vmem>>, vector<32x48xbf16>
    %cst = arith.constant dense<0.000000e+00> : vector<256x48xf32>
    %3 = tpu.matmul %1, %2, %cst {dimension_numbers = #tpu.dot_dimension_numbers<[1], [0], [0], [1], [0, 0, 1, 1], [], []>} : vector<256x32xbf16>, vector<32x48xbf16>, vector<256x48xf32> -> vector<256x48xf32>
    %c0_3 = arith.constant 0 : index
    %c0_4 = arith.constant 0 : index
    %4 = vector.load %arg3[%c0_3, %c0_4] : memref<1x48xf32, #tpu.memory_space<vmem>>, vector<1x48xf32>
    %5 = vector.broadcast %4 : vector<1x48xf32> to vector<256x48xf32>
    %6 = arith.addf %3, %5 : vector<256x48xf32>
    %c0_5 = arith.constant 0 : index
    %c0_6 = arith.constant 0 : index
    %7 = vector.load %arg4[%c0_5, %c0_6] : memref<256x48xf32, #tpu.memory_space<vmem>>, vector<256x48xf32>
    tpu.vector_store %arg4[%c0_5, %c0_6], %6 {strides = array<i32>} : memref<256x48xf32, #tpu.memory_space<vmem>>, vector<256x48xf32>,
    return
  }
  func.func @transform_0(%arg0: i32) -> (i32, i32) {
    %c0_i32 = arith.constant 0 : i32
    %c0_i32_0 = arith.constant 0 : i32
    return %arg0, %c0_i32 : i32, i32
  }
  func.func @transform_1(%arg0: i32) -> (i32, i32) {
    %c0_i32 = arith.constant 0 : i32
    %c0_i32_0 = arith.constant 0 : i32
    %c0_i32_1 = arith.constant 0 : i32
    return %c0_i32, %c0_i32_0 : i32, i32
  }
  func.func @transform_2(%arg0: i32) -> (i32, i32) {
    %c0_i32 = arith.constant 0 : i32
    %c0_i32_0 = arith.constant 0 : i32
    %c0_i32_1 = arith.constant 0 : i32
    return %c0_i32, %c0_i32_0 : i32, i32
  }
  func.func @transform_3(%arg0: i32) -> (i32, i32) {
    %c0_i32 = arith.constant 0 : i32
    %c0_i32_0 = arith.constant 0 : i32
    return %arg0, %c0_i32 : i32, i32
  }
}

</mosaic_0001>

<llo_original>
// kernel: tpu_custom_call.1
$region0: #{tpu_custom_call.1}
  #allocation0 [shape = 'u32[]', space=smem, size = 0x4, offset = 0x4, fixed_abs, tag = 'smem constant byte address 0x4 - core index']
  #allocation1 [shape = 'u32[144,128]{1,0:T(1,128)}', space=vmem, size = 0x12000, scoped, tag = 'internal scratch']
  %s0 = inlined_call_operand.vmem [shape: f32[512,32], index: 0, kind: input, shape index: {}]
  %s1 = inlined_call_operand.vmem [shape: bf16[32,48], index: 1, kind: input, shape index: {}]
  %s2 = inlined_call_operand.vmem [shape: f32[1,48], index: 2, kind: input, shape index: {}]
  %s3 = inlined_call_operand.vmem [shape: f32[512,48], index: 3, kind: output, shape index: {}]
  %s4 = sld [smem:[#allocation0]]
  $region45: #{tpu_custom_call.1} parent=0
    _
  %s6 = ssub.s32 1, %s4
  %s7 = scalar_select 0, %s6, %s4
  loop: start=0, step=1, limit=4
  $region2: #{tpu_custom_call.1} parent=0 // loop_pre_header
    _
  $region3: #{tpu_custom_call.1} parent=0 // loop_header
    %s9 = sphi 0, %s13
    %p10 = scmp.ge.s32.totalorder %s9, 4
    %s19 = sphi 0, %s21
    %s22 = sphi 0, %s19
    %s23 = sphi 0, %s22
    %s39 = sphi 0, %s23
    %s43 = sphi 0, %s43
    %s45 = sphi 0, %s43
    %s46 = sphi 0, %s45
    %s60 = sphi 0, %s46
    %s64 = sphi 0, %s64
    %s66 = sphi 0, %s64
    %s67 = sphi 0, %s66
    %s81 = sphi 0, %s67
    %s87 = sphi 0, %s89
    %s90 = sphi 0, %s87
    %s91 = sphi 0, %s90
    %s107 = sphi 0, %s91
  $region4: #{tpu_custom_call.1} parent=0 // loop_header_branch
    %12 = sbr.rel (%p10) target = $region8
  $region5: #{tpu_custom_call.1} parent=0 // loop_body
    %s14 = ssub.s32 %s9, 1
    %s15 = ssub.s32 %s9, 2
    %s16 = sadd.s32 %s9, 1
    %s17 = ssub.s32 %s9, %s16
    %p18 = scmp.eq.s32.totalorder %s17, 0
    %s20 = sadd.s32 %s19, 1
    %s21 = scalar_select %p18, %s19, %s20
    %p24 = pneg %p18
    %p25 = scmp.eq.s32.totalorder %s9, 1
    %p26 = por %p24, %p25
    %p27 = scmp.ne.s32.totalorder %s19, %s22
    %p28 = scmp.eq.s32.totalorder %s9, 0
    %p29 = por %p27, %p28
    %p30 = scmp.ne.s32.totalorder %s19, %s22
    %p31 = scmp.eq.s32.totalorder %s14, 1
    %p32 = por %p30, %p31
    %p33 = scmp.ne.s32.totalorder %s22, %s23
    %p34 = scmp.eq.s32.totalorder %s14, 0
    %p35 = por %p33, %p34
    %p36 = scmp.ne.s32.totalorder %s22, %s23
    %p37 = scmp.eq.s32.totalorder %s15, 1
    %p38 = por %p36, %p37
    %p40 = scmp.ne.s32.totalorder %s23, %s39
    %p41 = scmp.eq.s32.totalorder %s15, 0
    %p42 = por %p40, %p41
    %s44 = sadd.s32 %s43, 1
    %p47 = scmp.eq.s32.totalorder %s9, 1
    %p48 = scmp.ne.s32.totalorder %s43, %s45
    %p49 = scmp.eq.s32.totalorder %s9, 0
    %p50 = por %p48, %p49
    %p51 = scmp.ne.s32.totalorder %s43, %s45
    %p52 = scmp.eq.s32.totalorder %s14, 1
    %p53 = por %p51, %p52
    %p54 = scmp.ne.s32.totalorder %s45, %s46
    %p55 = scmp.eq.s32.totalorder %s14, 0
    %p56 = por %p54, %p55
    %p57 = scmp.ne.s32.totalorder %s45, %s46
    %p58 = scmp.eq.s32.totalorder %s15, 1
    %p59 = por %p57, %p58
    %p61 = scmp.ne.s32.totalorder %s46, %s60
    %p62 = scmp.eq.s32.totalorder %s15, 0
    %p63 = por %p61, %p62
    %s65 = sadd.s32 %s64, 1
    %p68 = scmp.eq.s32.totalorder %s9, 1
    %p69 = scmp.ne.s32.totalorder %s64, %s66
    %p70 = scmp.eq.s32.totalorder %s9, 0
    %p71 = por %p69, %p70
    %p72 = scmp.ne.s32.totalorder %s64, %s66
    %p73 = scmp.eq.s32.totalorder %s14, 1
    %p74 = por %p72, %p73
    %p75 = scmp.ne.s32.totalorder %s66, %s67
    %p76 = scmp.eq.s32.totalorder %s14, 0
    %p77 = por %p75, %p76
    %p78 = scmp.ne.s32.totalorder %s66, %s67
    %p79 = scmp.eq.s32.totalorder %s15, 1
    %p80 = por %p78, %p79
    %p82 = scmp.ne.s32.totalorder %s67, %s81
    %p83 = scmp.eq.s32.totalorder %s15, 0
    %p84 = por %p82, %p83
    %s85 = ssub.s32 %s9, %s16
    %p86 = scmp.eq.s32.totalorder %s85, 0
    %s88 = sadd.s32 %s87, 1
    %s89 = scalar_select %p86, %s87, %s88
    %p92 = pneg %p86
    %p93 = scmp.eq.s32.totalorder %s9, 1
    %p94 = por %p92, %p93
    %p95 = scmp.ne.s32.totalorder %s87, %s90
    %p96 = scmp.eq.s32.totalorder %s9, 0
    %p97 = por %p95, %p96
    %p98 = scmp.ne.s32.totalorder %s87, %s90
    %p99 = scmp.eq.s32.totalorder %s14, 1
    %p100 = por %p98, %p99
    %p101 = scmp.ne.s32.totalorder %s90, %s91
    %p102 = scmp.eq.s32.totalorder %s14, 0
    %p103 = por %p101, %p102
    %p104 = scmp.ne.s32.totalorder %s90, %s91
    %p105 = scmp.eq.s32.totalorder %s15, 1
    %p106 = por %p104, %p105
    %p108 = scmp.ne.s32.totalorder %s91, %s107
    %p109 = scmp.eq.s32.totalorder %s15, 0
    %p110 = por %p108, %p109
    %p111 = scmp.le.s32.totalorder 1, %s9
    %p112 = scmp.lt.s32.totalorder %s9, 3
    %p113 = pnand %p111, %p112
    %p114 = pneg %p113
    // Predicated region
    $region9: #{tpu_custom_call.1} parent=5 // pred_check
      _
    $region10: #{tpu_custom_call.1} parent=5 // pred_check_branch
      %116 = sbr.rel (%p113) target = $region12
    $region11: #{tpu_custom_call.1} parent=5 // pred_region
      %s117 = ssub.s32 %s9, 1
      // Predicated region
      $region13: #{tpu_custom_call.1} parent=11 // pred_check
        %p118 = pneg %p56
      $region14: #{tpu_custom_call.1} parent=11 // pred_check_branch
        %120 = sbr.rel (%p118) target = $region16
      $region15: #{tpu_custom_call.1} parent=11 // pred_region
        _
      $region16: #{tpu_custom_call.1} parent=11 // pred_fallthru
        _
      // Predicated region
      $region17: #{tpu_custom_call.1} parent=11 // pred_check
        %p121 = pneg %p77
      $region18: #{tpu_custom_call.1} parent=11 // pred_check_branch
        %123 = sbr.rel (%p121) target = $region20
      $region19: #{tpu_custom_call.1} parent=11 // pred_region
        _
      $region20: #{tpu_custom_call.1} parent=11 // pred_fallthru
        _
    $region12: #{tpu_custom_call.1} parent=5 // pred_fallthru
      _
    %p124 = scmp.lt.s32.totalorder %s9, 2
    // Predicated region
    $region21: #{tpu_custom_call.1} parent=5 // pred_check
      %p125 = pneg %p124
    $region22: #{tpu_custom_call.1} parent=5 // pred_check_branch
      %127 = sbr.rel (%p125) target = $region24
    $region23: #{tpu_custom_call.1} parent=5 // pred_region
      // Predicated region
      $region25: #{tpu_custom_call.1} parent=23 // pred_check
        %p128 = pneg %p29
      $region26: #{tpu_custom_call.1} parent=23 // pred_check_branch
        %130 = sbr.rel (%p128) target = $region28
      $region27: #{tpu_custom_call.1} parent=23 // pred_region
        %s131 = smul.u32 32, %s9
        %p132 = scmp.lt.s32.totalorder %s131, 63
        %s133 = scalar_select %p132, %s131, 63
        %s134 = smul.addr %s133, 8
        %s135 = scalar_lea.vmem %s0, %s134
        %s136 = smul.u32 32, %s9
      $region28: #{tpu_custom_call.1} parent=23 // pred_fallthru
        _
    $region24: #{tpu_custom_call.1} parent=5 // pred_fallthru
      _
    %p137 = scmp.le.s32.totalorder 1, %s9
    %p138 = scmp.lt.s32.totalorder %s9, 3
    %p139 = pnand %p137, %p138
    %p140 = pneg %p139
    // Predicated region
    $region29: #{tpu_custom_call.1} parent=5 // pred_check
      _
    $region30: #{tpu_custom_call.1} parent=5 // pred_check_branch
      %142 = sbr.rel (%p139) target = $region32
    $region31: #{tpu_custom_call.1} parent=5 // pred_region
      %s143 = ssub.s32 %s9, 1
      %s144 = smul.u32 32, %s14
      %p145 = scmp.lt.s32.totalorder %s144, 63
      %s146 = scalar_select %p145, %s144, 63
      %s147 = smul.addr %s146, 8
      %s148 = scalar_lea.vmem %s0, %s147
      %p149 = pneg %p35
      %p150 = pneg %p32
      %p151 = pneg %p56
      %p152 = pneg %p53
      %p153 = pneg %p77
      %p154 = pneg %p74
      %p155 = pneg %p103
      %p156 = pneg %p100
      %s157 = smul.u32 32, %s14
      %p158 = scmp.lt.s32.totalorder %s157, 63
      %s159 = scalar_select %p158, %s157, 63
      %s160 = smul.addr %s159, 8
      %s161 = scalar_lea.vmem %s3, %s160
      %s162 = smul.u32 32, %s14
      %p163 = scmp.lt.s32.totalorder %s162, 63
      %s164 = scalar_select %p163, %s162, 63
      %s165 = smul.addr %s164, 8
      %s166 = scalar_lea.vmem %s0, %s165
      %s167 = smul.u32 32, %s14
      %s168 = smul.u32 32, %s14
      %p169 = scmp.lt.s32.totalorder %s168, 63
      %s170 = scalar_select %p169, %s168, 63
      %s171 = smul.addr %s170, 8
      %s172 = scalar_lea.vmem %s3, %s171
      %s173 = smul.u32 32, %s14
      %v175 = vld [vmem:[%s166] sm:$0xff]
      %v176 = vld [vmem:[%s166 + $0x8] sm:$0xff]
      %v177 = vld [vmem:[%s166 + $0x10] sm:$0xff]
      %v178 = vld [vmem:[%s166 + $0x18] sm:$0xff]
      %v179 = vld [vmem:[%s166 + $0x20] sm:$0xff]
      %v180 = vld [vmem:[%s166 + $0x28] sm:$0xff]
      %v181 = vld [vmem:[%s166 + $0x30] sm:$0xff]
      %v182 = vld [vmem:[%s166 + $0x38] sm:$0xff]
      %v183 = vld [vmem:[%s166 + $0x40] sm:$0xff]
      %v184 = vld [vmem:[%s166 + $0x48] sm:$0xff]
      %v185 = vld [vmem:[%s166 + $0x50] sm:$0xff]
      %v186 = vld [vmem:[%s166 + $0x58] sm:$0xff]
      %v187 = vld [vmem:[%s166 + $0x60] sm:$0xff]
      %v188 = vld [vmem:[%s166 + $0x68] sm:$0xff]
      %v189 = vld [vmem:[%s166 + $0x70] sm:$0xff]
      %v190 = vld [vmem:[%s166 + $0x78] sm:$0xff]
      %v191 = vld [vmem:[%s166 + $0x80] sm:$0xff]
      %v192 = vld [vmem:[%s166 + $0x88] sm:$0xff]
      %v193 = vld [vmem:[%s166 + $0x90] sm:$0xff]
      %v194 = vld [vmem:[%s166 + $0x98] sm:$0xff]
      %v195 = vld [vmem:[%s166 + $0xa0] sm:$0xff]
      %v196 = vld [vmem:[%s166 + $0xa8] sm:$0xff]
      %v197 = vld [vmem:[%s166 + $0xb0] sm:$0xff]
      %v198 = vld [vmem:[%s166 + $0xb8] sm:$0xff]
      %v199 = vld [vmem:[%s166 + $0xc0] sm:$0xff]
      %v200 = vld [vmem:[%s166 + $0xc8] sm:$0xff]
      %v201 = vld [vmem:[%s166 + $0xd0] sm:$0xff]
      %v202 = vld [vmem:[%s166 + $0xd8] sm:$0xff]
      %v203 = vld [vmem:[%s166 + $0xe0] sm:$0xff]
      %v204 = vld [vmem:[%s166 + $0xe8] sm:$0xff]
      %v205 = vld [vmem:[%s166 + $0xf0] sm:$0xff]
      %v206 = vld [vmem:[%s166 + $0xf8] sm:$0xff]
      %v207 = vpack.c.bf16 %v176, %v175
      %v208 = vpack.c.bf16 %v178, %v177
      %v209 = vpack.c.bf16 %v180, %v179
      %v210 = vpack.c.bf16 %v182, %v181
      %v211 = vpack.c.bf16 %v184, %v183
      %v212 = vpack.c.bf16 %v186, %v185
      %v213 = vpack.c.bf16 %v188, %v187
      %v214 = vpack.c.bf16 %v190, %v189
      %v215 = vpack.c.bf16 %v192, %v191
      %v216 = vpack.c.bf16 %v194, %v193
      %v217 = vpack.c.bf16 %v196, %v195
      %v218 = vpack.c.bf16 %v198, %v197
      %v219 = vpack.c.bf16 %v200, %v199
      %v220 = vpack.c.bf16 %v202, %v201
      %v221 = vpack.c.bf16 %v204, %v203
      %v222 = vpack.c.bf16 %v206, %v205
      %v223 = vld [vmem:[%s1] sm:$0xf]
      %v224 = vld [vmem:[%s1 + $0x4] sm:$0xf]
      %v225 = vld [vmem:[%s1 + $0x8] sm:$0xf]
      %v226 = vld [vmem:[%s1 + $0xc] sm:$0xf]
      %v227 = vld [vmem:[%s2] sm:$0x1]
      %v229 = vlaneseq
      %v230 = vshrl.u32 %v229, 7
      %v231 = vsub.s32 0, %v230
      %v232 = vrot.slane %v227, %v231
      %v238 = vunpack.c.l.b16 %v223
      %v239 = vunpack.c.l.b16 %v224
      %v240 = vunpack.c.l.b16 %v225
      %v241 = vunpack.c.l.b16 %v226
      %v242 = vpack.c.b16 %v239, %v238
      %v243 = vpack.c.b16 %v241, %v240
      %vm246 = vcmask 261120
      %v248 = vsel %vm246, %v207, 0
      %v251 = vsel %vm246, %v208, 0
      %v254 = vsel %vm246, %v209, 0
      %v257 = vsel %vm246, %v210, 0
      %v260 = vsel %vm246, %v211, 0
      %v263 = vsel %vm246, %v212, 0
      %v266 = vsel %vm246, %v213, 0
      %v269 = vsel %vm246, %v214, 0
      %v272 = vsel %vm246, %v215, 0
      %v275 = vsel %vm246, %v216, 0
      %v278 = vsel %vm246, %v217, 0
      %v281 = vsel %vm246, %v218, 0
      %v284 = vsel %vm246, %v219, 0
      %v287 = vsel %vm246, %v220, 0
      %v290 = vsel %vm246, %v221, 0
      %v293 = vsel %vm246, %v222, 0
      %295 = vmatprep.subr.bf16.mxu0 0
      %296 = vmatpush1.bf16.msra.mxu0 %v242
      %297 = vmatprep.subr.bf16.mxu0 0
      %298 = vmatpush1.bf16.msra.mxu0 %v243
      %299 = vmatprep.subr.bf16.mxu0 0
      %300 = vmatpush1.bf16.msra.mxu0 0
      %301 = vmatprep.subr.bf16.mxu0 0
      %302 = vmatpush1.bf16.msra.mxu0 0
      %303 = vmatprep.subr.bf16.mxu0 0
      %304 = vmatpush1.bf16.msra.mxu0 0
      %305 = vmatprep.subr.bf16.mxu0 0
      %306 = vmatpush1.bf16.msra.mxu0 0
      %307 = vmatprep.subr.bf16.mxu0 0
      %308 = vmatpush1.bf16.msra.mxu0 0
      %309 = vmatprep.subr.bf16.mxu0 0
      %310 = vmatpush1.bf16.msra.mxu0 0
      %311 = vmatprep.subr.bf16.mxu0 0
      %312 = vmatpush1.bf16.msra.mxu0 0
      %313 = vmatprep.subr.bf16.mxu0 0
      %314 = vmatpush1.bf16.msra.mxu0 0
      %315 = vmatprep.subr.bf16.mxu0 0
      %316 = vmatpush1.bf16.msra.mxu0 0
      %317 = vmatprep.subr.bf16.mxu0 0
      %318 = vmatpush1.bf16.msra.mxu0 0
      %319 = vmatprep.subr.bf16.mxu0 0
      %320 = vmatpush1.bf16.msra.mxu0 0
      %321 = vmatprep.subr.bf16.mxu0 0
      %322 = vmatpush1.bf16.msra.mxu0 0
      %323 = vmatprep.subr.bf16.mxu0 0
      %324 = vmatpush1.bf16.msra.mxu0 0
      %325 = vmatprep.subr.bf16.mxu0 0
      %326 = vmatpush1.bf16.msra.mxu0 0
      %327 = vmatprep.mubr.bf16.mxu0 0
      %328 = vmatmul.mubr.bf16.gmra.mrb[0].mxu0 %v248
      %v329 = vpop.f32.mrb[0].mxu0
      %v330 = vadd.f32 %v232, %v329
      %v331 = vpop.f32.mrb[0].mxu0
      %v332 = vpop.f32.mrb[0].mxu0
      %v333 = vadd.f32 %v232, %v332
      %v334 = vpop.f32.mrb[0].mxu0
      %335 = vmatprep.mubr.bf16.mxu0 0
      %336 = vmatmul.mubr.bf16.gmra.mrb[0].mxu0 %v251
      %v337 = vpop.f32.mrb[0].mxu0
      %v338 = vadd.f32 %v232, %v337
      %v339 = vpop.f32.mrb[0].mxu0
      %v340 = vpop.f32.mrb[0].mxu0
      %v341 = vadd.f32 %v232, %v340
      %v342 = vpop.f32.mrb[0].mxu0
      %343 = vmatprep.mubr.bf16.mxu0 0
      %344 = vmatmul.mubr.bf16.gmra.mrb[0].mxu0 %v254
      %v345 = vpop.f32.mrb[0].mxu0
      %v346 = vadd.f32 %v232, %v345
      %v347 = vpop.f32.mrb[0].mxu0
      %v348 = vpop.f32.mrb[0].mxu0
      %v349 = vadd.f32 %v232, %v348
      %v350 = vpop.f32.mrb[0].mxu0
      %351 = vmatprep.mubr.bf16.mxu0 0
      %352 = vmatmul.mubr.bf16.gmra.mrb[0].mxu0 %v257
      %v353 = vpop.f32.mrb[0].mxu0
      %v354 = vadd.f32 %v232, %v353
      %v355 = vpop.f32.mrb[0].mxu0
      %v356 = vpop.f32.mrb[0].mxu0
      %v357 = vadd.f32 %v232, %v356
      %v358 = vpop.f32.mrb[0].mxu0
      %359 = vmatprep.mubr.bf16.mxu0 0
      %360 = vmatmul.mubr.bf16.gmra.mrb[0].mxu0 %v260
      %v361 = vpop.f32.mrb[0].mxu0
      %v362 = vadd.f32 %v232, %v361
      %v363 = vpop.f32.mrb[0].mxu0
      %v364 = vpop.f32.mrb[0].mxu0
      %v365 = vadd.f32 %v232, %v364
      %v366 = vpop.f32.mrb[0].mxu0
      %367 = vmatprep.mubr.bf16.mxu0 0
      %368 = vmatmul.mubr.bf16.gmra.mrb[0].mxu0 %v263
      %v369 = vpop.f32.mrb[0].mxu0
      %v370 = vadd.f32 %v232, %v369
      %v371 = vpop.f32.mrb[0].mxu0
      %v372 = vpop.f32.mrb[0].mxu0
      %v373 = vadd.f32 %v232, %v372
      %v374 = vpop.f32.mrb[0].mxu0
      %375 = vmatprep.mubr.bf16.mxu0 0
      %376 = vmatmul.mubr.bf16.gmra.mrb[0].mxu0 %v266
      %v377 = vpop.f32.mrb[0].mxu0
      %v378 = vadd.f32 %v232, %v377
      %v379 = vpop.f32.mrb[0].mxu0
      %v380 = vpop.f32.mrb[0].mxu0
      %v381 = vadd.f32 %v232, %v380
      %v382 = vpop.f32.mrb[0].mxu0
      %383 = vmatprep.mubr.bf16.mxu0 0
      %384 = vmatmul.mubr.bf16.gmra.mrb[0].mxu0 %v269
      %v385 = vpop.f32.mrb[0].mxu0
      %v386 = vadd.f32 %v232, %v385
      %v387 = vpop.f32.mrb[0].mxu0
      %v388 = vpop.f32.mrb[0].mxu0
      %v389 = vadd.f32 %v232, %v388
      %v390 = vpop.f32.mrb[0].mxu0
      %391 = vmatprep.mubr.bf16.mxu0 0
      %392 = vmatmul.mubr.bf16.gmra.mrb[0].mxu0 %v272
      %v393 = vpop.f32.mrb[0].mxu0
      %v394 = vadd.f32 %v232, %v393
      %v395 = vpop.f32.mrb[0].mxu0
      %v396 = vpop.f32.mrb[0].mxu0
      %v397 = vadd.f32 %v232, %v396
      %v398 = vpop.f32.mrb[0].mxu0
      %399 = vmatprep.mubr.bf16.mxu0 0
      %400 = vmatmul.mubr.bf16.gmra.mrb[0].mxu0 %v275
      %v401 = vpop.f32.mrb[0].mxu0
      %v402 = vadd.f32 %v232, %v401
      %v403 = vpop.f32.mrb[0].mxu0
      %v404 = vpop.f32.mrb[0].mxu0
      %v405 = vadd.f32 %v232, %v404
      %v406 = vpop.f32.mrb[0].mxu0
      %407 = vmatprep.mubr.bf16.mxu0 0
      %408 = vmatmul.mubr.bf16.gmra.mrb[0].mxu0 %v278
      %v409 = vpop.f32.mrb[0].mxu0
      %v410 = vadd.f32 %v232, %v409
      %v411 = vpop.f32.mrb[0].mxu0
      %v412 = vpop.f32.mrb[0].mxu0
      %v413 = vadd.f32 %v232, %v412
      %v414 = vpop.f32.mrb[0].mxu0
      %415 = vmatprep.mubr.bf16.mxu0 0
      %416 = vmatmul.mubr.bf16.gmra.mrb[0].mxu0 %v281
      %v417 = vpop.f32.mrb[0].mxu0
      %v418 = vadd.f32 %v232, %v417
      %v419 = vpop.f32.mrb[0].mxu0
      %v420 = vpop.f32.mrb[0].mxu0
      %v421 = vadd.f32 %v232, %v420
      %v422 = vpop.f32.mrb[0].mxu0
      %423 = vmatprep.mubr.bf16.mxu0 0
      %424 = vmatmul.mubr.bf16.gmra.mrb[0].mxu0 %v284
      %v425 = vpop.f32.mrb[0].mxu0
      %v426 = vadd.f32 %v232, %v425
      %v427 = vpop.f32.mrb[0].mxu0
      %v428 = vpop.f32.mrb[0].mxu0
      %v429 = vadd.f32 %v232, %v428
      %v430 = vpop.f32.mrb[0].mxu0
      %431 = vmatprep.mubr.bf16.mxu0 0
      %432 = vmatmul.mubr.bf16.gmra.mrb[0].mxu0 %v287
      %v433 = vpop.f32.mrb[0].mxu0
      %v434 = vadd.f32 %v232, %v433
      %v435 = vpop.f32.mrb[0].mxu0
      %v436 = vpop.f32.mrb[0].mxu0
      %v437 = vadd.f32 %v232, %v436
      %v438 = vpop.f32.mrb[0].mxu0
      %439 = vmatprep.mubr.bf16.mxu0 0
      %440 = vmatmul.mubr.bf16.gmra.mrb[0].mxu0 %v290
      %v441 = vpop.f32.mrb[0].mxu0
      %v442 = vadd.f32 %v232, %v441
      %v443 = vpop.f32.mrb[0].mxu0
      %v444 = vpop.f32.mrb[0].mxu0
      %v445 = vadd.f32 %v232, %v444
      %v446 = vpop.f32.mrb[0].mxu0
      %447 = vmatprep.mubr.bf16.mxu0 0
      %448 = vmatmul.mubr.bf16.gmra.mrb[0].mxu0 %v293
      %v449 = vpop.f32.mrb[0].mxu0
      %v450 = vadd.f32 %v232, %v449
      %v451 = vpop.f32.mrb[0].mxu0
      %v452 = vpop.f32.mrb[0].mxu0
      %v453 = vadd.f32 %v232, %v452
      %v454 = vpop.f32.mrb[0].mxu0
      %455 = vdwg.mxu0
      %vm456 = vcmask 392192
      %457 = vst.msk [vmem:[%s172] sm:$0xff] %vm456, %v330
      %458 = vst.msk [vmem:[%s172 + $0x8] sm:$0xff] %vm456, %v333
      %459 = vst.msk [vmem:[%s172 + $0x10] sm:$0xff] %vm456, %v338
      %460 = vst.msk [vmem:[%s172 + $0x18] sm:$0xff] %vm456, %v341
      %461 = vst.msk [vmem:[%s172 + $0x20] sm:$0xff] %vm456, %v346
      %462 = vst.msk [vmem:[%s172 + $0x28] sm:$0xff] %vm456, %v349
      %463 = vst.msk [vmem:[%s172 + $0x30] sm:$0xff] %vm456, %v354
      %464 = vst.msk [vmem:[%s172 + $0x38] sm:$0xff] %vm456, %v357
      %465 = vst.msk [vmem:[%s172 + $0x40] sm:$0xff] %vm456, %v362
      %466 = vst.msk [vmem:[%s172 + $0x48] sm:$0xff] %vm456, %v365
      %467 = vst.msk [vmem:[%s172 + $0x50] sm:$0xff] %vm456, %v370
      %468 = vst.msk [vmem:[%s172 + $0x58] sm:$0xff] %vm456, %v373
      %469 = vst.msk [vmem:[%s172 + $0x60] sm:$0xff] %vm456, %v378
      %470 = vst.msk [vmem:[%s172 + $0x68] sm:$0xff] %vm456, %v381
      %471 = vst.msk [vmem:[%s172 + $0x70] sm:$0xff] %vm456, %v386
      %472 = vst.msk [vmem:[%s172 + $0x78] sm:$0xff] %vm456, %v389
      %473 = vst.msk [vmem:[%s172 + $0x80] sm:$0xff] %vm456, %v394
      %474 = vst.msk [vmem:[%s172 + $0x88] sm:$0xff] %vm456, %v397
      %475 = vst.msk [vmem:[%s172 + $0x90] sm:$0xff] %vm456, %v402
      %476 = vst.msk [vmem:[%s172 + $0x98] sm:$0xff] %vm456, %v405
      %477 = vst.msk [vmem:[%s172 + $0xa0] sm:$0xff] %vm456, %v410
      %478 = vst.msk [vmem:[%s172 + $0xa8] sm:$0xff] %vm456, %v413
      %479 = vst.msk [vmem:[%s172 + $0xb0] sm:$0xff] %vm456, %v418
      %480 = vst.msk [vmem:[%s172 + $0xb8] sm:$0xff] %vm456, %v421
      %481 = vst.msk [vmem:[%s172 + $0xc0] sm:$0xff] %vm456, %v426
      %482 = vst.msk [vmem:[%s172 + $0xc8] sm:$0xff] %vm456, %v429
      %483 = vst.msk [vmem:[%s172 + $0xd0] sm:$0xff] %vm456, %v434
      %484 = vst.msk [vmem:[%s172 + $0xd8] sm:$0xff] %vm456, %v437
      %485 = vst.msk [vmem:[%s172 + $0xe0] sm:$0xff] %vm456, %v442
      %486 = vst.msk [vmem:[%s172 + $0xe8] sm:$0xff] %vm456, %v445
      %487 = vst.msk [vmem:[%s172 + $0xf0] sm:$0xff] %vm456, %v450
      %488 = vst.msk [vmem:[%s172 + $0xf8] sm:$0xff] %vm456, %v453
      %s489 = smul.u32 32, %s14
      %p490 = scmp.lt.s32.totalorder %s489, 63
      %s491 = scalar_select %p490, %s489, 63
      %s492 = smul.addr %s491, 8
      %s493 = scalar_lea.vmem %s3, %s492
      // Predicated region
      $region33: #{tpu_custom_call.1} parent=31 // pred_check
        %p494 = pneg %p100
      $region34: #{tpu_custom_call.1} parent=31 // pred_check_branch
        %496 = sbr.rel (%p494) target = $region36
      $region35: #{tpu_custom_call.1} parent=31 // pred_region
        %s497 = smul.u32 32, %s14
      $region36: #{tpu_custom_call.1} parent=31 // pred_fallthru
        _
    $region32: #{tpu_custom_call.1} parent=5 // pred_fallthru
      _
    %p498 = scmp.le.s32.totalorder 2, %s9
    // Predicated region
    $region37: #{tpu_custom_call.1} parent=5 // pred_check
      %p499 = pneg %p498
    $region38: #{tpu_custom_call.1} parent=5 // pred_check_branch
      %501 = sbr.rel (%p499) target = $region40
    $region39: #{tpu_custom_call.1} parent=5 // pred_region
      %s502 = ssub.s32 %s9, 2
      // Predicated region
      $region41: #{tpu_custom_call.1} parent=39 // pred_check
        %p503 = pneg %p106
      $region42: #{tpu_custom_call.1} parent=39 // pred_check_branch
        %505 = sbr.rel (%p503) target = $region44
      $region43: #{tpu_custom_call.1} parent=39 // pred_region
        %s506 = smul.u32 32, %s15
        %p507 = scmp.lt.s32.totalorder %s506, 63
        %s508 = scalar_select %p507, %s506, 63
        %s509 = smul.addr %s508, 8
        %s510 = scalar_lea.vmem %s3, %s509
      $region44: #{tpu_custom_call.1} parent=39 // pred_fallthru
        _
    $region40: #{tpu_custom_call.1} parent=5 // pred_fallthru
      _
  $region6: #{tpu_custom_call.1} parent=0 // loop_footer
    %s13 = sadd.s32 1, %s9
  $region7: #{tpu_custom_call.1} parent=0 // loop_footer_branch
    %8 = sbr.rel target = $region3
  $region8: #{tpu_custom_call.1} parent=0 // loop_exit
    _

</llo_original>
